<compile_context>
chip_gen: v6e
topology: v6e:2x2x1
jax: 0.10.0
libtpu: 0.0.40
codegen_flags: <defaults>
</compile_context>

<pallas_src>
import functools
import math

import jax
import jax.numpy as jnp
from jax import lax
from jax.experimental import pallas as pl
from jax.experimental.pallas import tpu as pltpu


_VMEM_LIMIT_BYTES = 48 * 1024 * 1024     # safe on v5e/v6e (128 MiB) and v7x (64 MiB/TC)
_FUSED_VMEM_BUDGET = 32 * 1024 * 1024    # max estimated VMEM for the fused single-pass path
_PASS1_TILE_BYTES = 6 * 1024 * 1024      # stats pass: only the input is multi-buffered
_PASS2_TILE_BYTES = 4 * 1024 * 1024      # apply pass: input + output double-buffered


def _round_up(x, m):
    return (x + m - 1) // m * m


def _pick_tile_rows(rows_total, cp, target_bytes):
    """Row-tile size: ~target_bytes per lane-padded f32-equivalent tile, multiple of 8."""
    lane_bytes = _round_up(cp, 128) * 4
    rows = max(8, (target_bytes // lane_bytes) // 8 * 8)
    if rows_total >= 8:
        rows = min(rows, (rows_total // 8) * 8)
    else:
        rows = rows_total  # degenerate tiny case: single full-extent block
    return rows


# ---------------------------------------------------------------------------
# Fused path: whole x resident in VMEM -> stats + normalize in one kernel.
# ---------------------------------------------------------------------------
def _bn_fused_kernel(x_ref, gamma_ref, beta_ref, o_ref, *, count, eps):
    x = x_ref[...].astype(jnp.float32)
    inv_n = jnp.float32(1.0 / count)
    mean = jnp.sum(x, axis=0, keepdims=True) * inv_n
    ex2 = jnp.sum(x * x, axis=0, keepdims=True) * inv_n
    var = jnp.maximum(ex2 - mean * mean, 0.0)          # biased var, clamped >= 0
    inv_std = lax.rsqrt(var + jnp.float32(eps))
    scale = gamma_ref[...] * inv_std
    shift = beta_ref[...] - mean * scale
    o_ref[...] = (x * scale + shift).astype(o_ref.dtype)


# ---------------------------------------------------------------------------
# Streaming pass 1: per-channel sum / sum-of-squares (two core-halves).
# ---------------------------------------------------------------------------
def _make_stats_kernel(tile_r, cp, rows_valid, tiles_total, tiles_per_core):
    start1 = tiles_total - tiles_per_core            # first tile of core-half 1
    dup_tile = (2 * tiles_per_core != tiles_total)   # halves overlap on exactly one tile
    ragged = (rows_valid % tile_r != 0)
    sublane_partials = (tile_r % 8 == 0)

    def kernel(x_ref, sum_ref, sumsq_ref):
        c = pl.program_id(0)    # core-half
        i = pl.program_id(1)    # tile within the half

        @pl.when(i == 0)
        def _init():
            sum_ref[...] = jnp.zeros_like(sum_ref)
            sumsq_ref[...] = jnp.zeros_like(sumsq_ref)

        x = x_ref[...].astype(jnp.float32)

        if ragged or dup_tile:
            # Logical tile id: core-half c owns tiles [c*start1, c*start1 + tiles_per_core).
            row0 = (c * start1 + i) * tile_r
            rows = lax.broadcasted_iota(jnp.int32, (tile_r, cp), 0)
            valid = (row0 + rows) < rows_valid
            if dup_tile:
                # The overlapping tile is counted only by core-half 0.
                valid = jnp.logical_and(valid, jnp.logical_or(c == 0, i != 0))
            x = jnp.where(valid, x, 0.0)

        if sublane_partials:
            # 8 sublane partial accumulators per channel (accuracy + no masked RMW).
            xg = x.reshape(tile_r // 8, 8, cp)
            sum_ref[...] += jnp.sum(xg, axis=0)
            sumsq_ref[...] += jnp.sum(xg * xg, axis=0)
        else:
            sum_ref[0:1, :] += jnp.sum(x, axis=0, keepdims=True)
            sumsq_ref[0:1, :] += jnp.sum(x * x, axis=0, keepdims=True)

    return kernel


# ---------------------------------------------------------------------------
# Streaming pass 2: y = x * scale + shift (affine folded into one FMA/element).
# ---------------------------------------------------------------------------
def _bn_apply_kernel(x_ref, scale_ref, shift_ref, o_ref):
    x = x_ref[...].astype(jnp.float32)
    o_ref[...] = (x * scale_ref[...] + shift_ref[...]).astype(o_ref.dtype)


def batch_norm_4t(x, gamma, beta, eps=1e-5):
    """x: (N, T, C); gamma, beta: (C,). Training-mode BatchNorm over the (N, T) axes."""
    N, T, C = x.shape
    R = N * T
    count = float(R)
    gamma_f = gamma.astype(jnp.float32).reshape(1, C)
    beta_f = beta.astype(jnp.float32).reshape(1, C)
    itemsize = jnp.dtype(x.dtype).itemsize

    # ------------------ fused single-pass path (x resident in VMEM) ------------------
    padded_elems = _round_up(R, 8) * _round_up(C, 128)
    fused_bytes = padded_elems * (4 * itemsize + 8)   # in/out (x2 buffers) + f32 temps
    if fused_bytes <= _FUSED_VMEM_BUDGET:
        out2d = pl.pallas_call(
            functools.partial(_bn_fused_kernel, count=count, eps=float(eps)),
            out_shape=jax.ShapeDtypeStruct((R, C), x.dtype),
            grid=(1,),
            in_specs=[
                pl.BlockSpec((R, C), lambda i: (0, 0)),
                pl.BlockSpec((1, C), lambda i: (0, 0)),
                pl.BlockSpec((1, C), lambda i: (0, 0)),
            ],
            out_specs=pl.BlockSpec((R, C), lambda i: (0, 0)),
            compiler_params=pltpu.CompilerParams(
                dimension_semantics=("arbitrary",),
                vmem_limit_bytes=_VMEM_LIMIT_BYTES,
            ),
        )(x.reshape(R, C), gamma_f, beta_f)
        return out2d.reshape(N, T, C)

    # --------------------------------- streaming path --------------------------------
    # Lane-dense repacking: fold k rows into the lane axis (pure reshape, no copy).
    k = 1
    if C % 128 != 0:
        k_cand = 128 // math.gcd(C, 128)
        k = math.gcd(R, k_cand)     # best fold that divides R (no jnp.pad round trip)
        if R // k < 8:
            k = 1
    Cp = C * k
    Rp = R // k
    x2d = x.reshape(Rp, Cp)

    # ---- pass 1: per-channel sum / sum-of-squares, split across two core-halves ----
    tile_r1 = _pick_tile_rows(Rp, Cp, _PASS1_TILE_BYTES)
    num_tiles1 = pl.cdiv(Rp, tile_r1)
    tpc = pl.cdiv(num_tiles1, 2)                 # tiles per core-half
    start1 = num_tiles1 - tpc                    # core-half 1 starts here (never OOB)

    sums, sumsqs = pl.pallas_call(
        _make_stats_kernel(tile_r1, Cp, Rp, num_tiles1, tpc),
        out_shape=(
            jax.ShapeDtypeStruct((16, Cp), jnp.float32),   # 2 halves x 8 sublane partials
            jax.ShapeDtypeStruct((16, Cp), jnp.float32),
        ),
        grid=(2, tpc),
        in_specs=[
            pl.BlockSpec((tile_r1, Cp), lambda c, i, s=start1: (c * s + i, 0),
                         pipeline_mode=pl.Buffered(3)),
        ],
        out_specs=(
            pl.BlockSpec((8, Cp), lambda c, i: (c, 0)),
            pl.BlockSpec((8, Cp), lambda c, i: (c, 0)),
        ),
        compiler_params=pltpu.CompilerParams(
            dimension_semantics=("parallel", "arbitrary"),
            vmem_limit_bytes=_VMEM_LIMIT_BYTES,
        ),
    )(x2d)

    # ---- tiny (C,)-sized XLA combine: fold affine into scale / shift ----------------
    sums_c = sums.reshape(-1, k, C).sum(axis=(0, 1))
    sumsqs_c = sumsqs.reshape(-1, k, C).sum(axis=(0, 1))
    mean = sums_c / count
    var = jnp.maximum(sumsqs_c / count - mean * mean, 0.0)   # biased var, clamped >= 0
    inv_std = lax.rsqrt(var + jnp.float32(eps))
    scale_c = gamma_f.reshape(C) * inv_std
    shift_c = beta_f.reshape(C) - mean * scale_c
    scale = jnp.tile(scale_c, k).reshape(1, Cp)
    shift = jnp.tile(shift_c, k).reshape(1, Cp)

    # ---- pass 2: normalize (ragged tail via Pallas partial-block output masking) ----
    tile_r2 = _pick_tile_rows(Rp, Cp, _PASS2_TILE_BYTES)
    num_tiles2 = pl.cdiv(Rp, tile_r2)

    out2d = pl.pallas_call(
        _bn_apply_kernel,
        out_shape=jax.ShapeDtypeStruct((Rp, Cp), x.dtype),
        grid=(num_tiles2,),
        in_specs=[
            pl.BlockSpec((tile_r2, Cp), lambda i: (i, 0)),
            pl.BlockSpec((1, Cp), lambda i: (0, 0)),     # scale: VMEM-resident
            pl.BlockSpec((1, Cp), lambda i: (0, 0)),     # shift: VMEM-resident
        ],
        out_specs=pl.BlockSpec((tile_r2, Cp), lambda i: (i, 0)),
        compiler_params=pltpu.CompilerParams(
            dimension_semantics=("parallel",),           # independent tiles -> megacore
            vmem_limit_bytes=_VMEM_LIMIT_BYTES,
        ),
    )(x2d, scale, shift)

    return out2d.reshape(N, T, C)


def _reference(x, gamma, beta, eps=1e-5):
    xf = x.astype(jnp.float32)
    mean = jnp.mean(xf, axis=(0, 1), keepdims=True)
    var = jnp.mean((xf - mean) ** 2, axis=(0, 1), keepdims=True)
    y = (xf - mean) / jnp.sqrt(var + eps)
    return (y * gamma.reshape(1, 1, -1) + beta.reshape(1, 1, -1)).astype(x.dtype)


if __name__ == "__main__":
    key = jax.random.PRNGKey(0)
    kx, kg, kb, kx2 = jax.random.split(key, 4)

    # Small shape consistent with the module (batch=2, seq=8, num_features=32):
    # exercises the fused single-pass path.
    N, T, C = 2, 8, 32
    x = jax.random.normal(kx, (N, T, C), dtype=jnp.float32)
    gamma = 1.0 + 0.1 * jax.random.normal(kg, (C,), dtype=jnp.float32)
    beta = 0.1 * jax.random.normal(kb, (C,), dtype=jnp.float32)

    out = jax.block_until_ready(batch_norm_4t(x, gamma, beta, eps=1e-5))
    ref = _reference(x, gamma, beta, eps=1e-5)
    assert out.shape == (N, T, C)
    assert jnp.allclose(out, ref, atol=2e-5, rtol=2e-5), "fused path mismatch vs reference"

    # Larger shape: exercises the streaming 2-pass path (lane fold k=4, odd pass-1
    # tile count -> core-split overlap masking, ragged pass-2 tail).
    N2, T2, C2 = 12, 4096, 96
    x2 = jax.random.normal(kx2, (N2, T2, C2), dtype=jnp.float32)
    gamma2 = 1.0 + 0.1 * jax.random.normal(kg, (C2,), dtype=jnp.float32)
    beta2 = 0.1 * jax.random.normal(kb, (C2,), dtype=jnp.float32)

    out2 = jax.block_until_ready(batch_norm_4t(x2, gamma2, beta2, eps=1e-5))
    ref2 = _reference(x2, gamma2, beta2, eps=1e-5)
    assert out2.shape == (N2, T2, C2)
    assert jnp.allclose(out2, ref2, atol=1e-3, rtol=1e-3), "streaming path mismatch vs reference"

    print("KERNEL_OK")
</pallas_src>

<mosaic_0001>
module attributes {stable_mosaic.version = 11 : i64} {
  func.func @_bn_fused_kernel(%arg0: i32, %arg1: memref<16x32xf32, #tpu.memory_space<vmem>>, %arg2: memref<1x32xf32, #tpu.memory_space<vmem>>, %arg3: memref<1x32xf32, #tpu.memory_space<vmem>>, %arg4: memref<16x32xf32, #tpu.memory_space<vmem>>) attributes {dimension_semantics = [#tpu.dimension_semantics<arbitrary>], iteration_bounds = array<i64: 1>, scalar_prefetch = 0 : i64, scratch_operands = 0 : i64, tpu.core_type = #tpu.core_type<tc>, window_params = [{pipeline_mode = #tpu.pipeline_mode<synchronous>, transform_indices = @transform_0, window_bounds = array<i64: 16, 32>}, {pipeline_mode = #tpu.pipeline_mode<synchronous>, transform_indices = @transform_1, window_bounds = array<i64: 1, 32>}, {pipeline_mode = #tpu.pipeline_mode<synchronous>, transform_indices = @transform_2, window_bounds = array<i64: 1, 32>}, {pipeline_mode = #tpu.pipeline_mode<synchronous>, transform_indices = @transform_3, window_bounds = array<i64: 16, 32>}]} {
    %c0 = arith.constant 0 : index
    %c0_0 = arith.constant 0 : index
    %0 = vector.load %arg1[%c0, %c0_0] : memref<16x32xf32, #tpu.memory_space<vmem>>, vector<16x32xf32>
    %cst = arith.constant dense<0.000000e+00> : vector<32xf32>
    %1 = vector.multi_reduction <add>, %0, %cst [0] : vector<16x32xf32> to vector<32xf32>
    %2 = vector.shape_cast %1 : vector<32xf32> to vector<1x32xf32>
    %cst_1 = arith.constant 6.250000e-02 : f32
    %3 = vector.broadcast %cst_1 : f32 to vector<1x32xf32>
    %4 = arith.mulf %2, %3 : vector<1x32xf32>
    %5 = arith.mulf %0, %0 : vector<16x32xf32>
    %cst_2 = arith.constant dense<0.000000e+00> : vector<32xf32>
    %6 = vector.multi_reduction <add>, %5, %cst_2 [0] : vector<16x32xf32> to vector<32xf32>
    %7 = vector.shape_cast %6 : vector<32xf32> to vector<1x32xf32>
    %cst_3 = arith.constant 6.250000e-02 : f32
    %8 = vector.broadcast %cst_3 : f32 to vector<1x32xf32>
    %9 = arith.mulf %7, %8 : vector<1x32xf32>
    %10 = arith.mulf %4, %4 : vector<1x32xf32>
    %11 = arith.subf %9, %10 : vector<1x32xf32>
    %cst_4 = arith.constant 0.000000e+00 : f32
    %12 = vector.broadcast %cst_4 : f32 to vector<1x32xf32>
    %13 = arith.maximumf %11, %12 : vector<1x32xf32>
    %cst_5 = arith.constant 9.99999974E-6 : f32
    %14 = vector.broadcast %cst_5 : f32 to vector<1x32xf32>
    %15 = arith.addf %13, %14 : vector<1x32xf32>
    %16 = math.rsqrt %15 : vector<1x32xf32>
    %c0_6 = arith.constant 0 : index
    %c0_7 = arith.constant 0 : index
    %17 = vector.load %arg2[%c0_6, %c0_7] : memref<1x32xf32, #tpu.memory_space<vmem>>, vector<1x32xf32>
    %18 = arith.mulf %17, %16 : vector<1x32xf32>
    %c0_8 = arith.constant 0 : index
    %c0_9 = arith.constant 0 : index
    %19 = vector.load %arg3[%c0_8, %c0_9] : memref<1x32xf32, #tpu.memory_space<vmem>>, vector<1x32xf32>
    %20 = arith.mulf %4, %18 : vector<1x32xf32>
    %21 = arith.subf %19, %20 : vector<1x32xf32>
    %22 = vector.broadcast %18 : vector<1x32xf32> to vector<16x32xf32>
    %23 = arith.mulf %0, %22 : vector<16x32xf32>
    %24 = vector.broadcast %21 : vector<1x32xf32> to vector<16x32xf32>
    %25 = arith.addf %23, %24 : vector<16x32xf32>
    %c0_10 = arith.constant 0 : index
    %c0_11 = arith.constant 0 : index
    %26 = vector.load %arg4[%c0_10, %c0_11] : memref<16x32xf32, #tpu.memory_space<vmem>>, vector<16x32xf32>
    tpu.vector_store %arg4[%c0_10, %c0_11], %25 {strides = array<i32>} : memref<16x32xf32, #tpu.memory_space<vmem>>, vector<16x32xf32>,
    return
  }
  func.func @transform_0(%arg0: i32) -> (i32, i32) {
    %c0_i32 = arith.constant 0 : i32
    %c0_i32_0 = arith.constant 0 : i32
    %c0_i32_1 = arith.constant 0 : i32
    return %c0_i32, %c0_i32_0 : i32, i32
  }
  func.func @transform_1(%arg0: i32) -> (i32, i32) {
    %c0_i32 = arith.constant 0 : i32
    %c0_i32_0 = arith.constant 0 : i32
    %c0_i32_1 = arith.constant 0 : i32
    return %c0_i32, %c0_i32_0 : i32, i32
  }
  func.func @transform_2(%arg0: i32) -> (i32, i32) {
    %c0_i32 = arith.constant 0 : i32
    %c0_i32_0 = arith.constant 0 : i32
    %c0_i32_1 = arith.constant 0 : i32
    return %c0_i32, %c0_i32_0 : i32, i32
  }
  func.func @transform_3(%arg0: i32) -> (i32, i32) {
    %c0_i32 = arith.constant 0 : i32
    %c0_i32_0 = arith.constant 0 : i32
    %c0_i32_1 = arith.constant 0 : i32
    return %c0_i32, %c0_i32_0 : i32, i32
  }
}

</mosaic_0001>

<llo_original>
// kernel: tpu_custom_call.1
$region0: #{tpu_custom_call.1}
  #allocation0 [shape = 'u32[]', space=smem, size = 0x4, offset = 0x4, fixed_abs, tag = 'smem constant byte address 0x4 - core index']
  #allocation1 [shape = 'u32[144,128]{1,0:T(1,128)}', space=vmem, size = 0x12000, scoped, tag = 'internal scratch']
  %s0 = inlined_call_operand.hbm [shape: f32[16,32], index: 0, kind: input, shape index: {}]
  %s1 = inlined_call_operand.vmem [shape: f32[1,32], index: 1, kind: input, shape index: {}]
  %s2 = inlined_call_operand.vmem [shape: f32[1,32], index: 2, kind: input, shape index: {}]
  %s3 = inlined_call_operand.hbm [shape: f32[16,32], index: 3, kind: output, shape index: {}]
  %s4 = sld [smem:[#allocation0]]
  $region26: #{tpu_custom_call.1} parent=0
    _
  %s6 = ssub.s32 1, %s4
  %s7 = scalar_select 0, %s6, %s4
  $region1: #{tpu_custom_call.1} parent=0
    #allocation2 [shape = 'u8[8192]{0}', space=vmem, size = 0x2000, scoped, tag = 'input window, operand 0, single buffered']
    #allocation3 [shape = 's32[1]{0}', space=sflag, size = 0x4, scoped, tag = 'scoped memory for tpu_custom_call.1']
    #allocation4 [shape = 's32[1]{0}', space=sflag, size = 0x4, scoped, tag = 'scoped memory for tpu_custom_call.1']
    #allocation5 [shape = 'u8[8192]{0}', space=vmem, size = 0x2000, scoped, tag = 'output window, operand 0, single buffered']
    %8 = vsyncpa [#allocation3], 0
    %9 = vsyncpa [#allocation4], 0
    // Predicated region
    $region2: #{tpu_custom_call.1} parent=1 // pred_check
      _
    $region3: #{tpu_custom_call.1} parent=1 // pred_check_branch
      %11 = sbr.rel (0) target = $region5
    $region4: #{tpu_custom_call.1} parent=1 // pred_region
      %s13 = ssub.s32 256, 256
      %14 = vsyncadd [#allocation3], %s13
      %s15 = sshll.u32 [#allocation2], 4
      %s16 = int_to_ptr.vmem [resolvable:$true] %s15
      %21 = dma.hbm_to_vmem [thread:$0]  %s0, 256, %s16, [#allocation3], 128, 128, 8
    $region5: #{tpu_custom_call.1} parent=1 // pred_fallthru
      _
    // Predicated region
    $region6: #{tpu_custom_call.1} parent=1 // pred_check
      _
    $region7: #{tpu_custom_call.1} parent=1 // pred_check_branch
      %23 = sbr.rel (0) target = $region9
    $region8: #{tpu_custom_call.1} parent=1 // pred_region
      _
    $region9: #{tpu_custom_call.1} parent=1 // pred_fallthru
      _
    // Predicated region
    $region10: #{tpu_custom_call.1} parent=1 // pred_check
      _
    $region11: #{tpu_custom_call.1} parent=1 // pred_check_branch
      %25 = sbr.rel (0) target = $region13
    $region12: #{tpu_custom_call.1} parent=1 // pred_region
      _
    $region13: #{tpu_custom_call.1} parent=1 // pred_fallthru
      _
    // Predicated region
    $region14: #{tpu_custom_call.1} parent=1 // pred_check
      _
    $region15: #{tpu_custom_call.1} parent=1 // pred_check_branch
      %27 = sbr.rel (0) target = $region17
    $region16: #{tpu_custom_call.1} parent=1 // pred_region
      %28 = dma.done [#allocation3], 256
    $region17: #{tpu_custom_call.1} parent=1 // pred_fallthru
      _
    %v29 = vld [vmem:[#allocation2] sm:$0xff]
    %v30 = vld [vmem:[#allocation2 + $0x8] sm:$0xff]
    %vm31 = vcmask 261120
    %v32 = vsel %vm31, %v29, 0.0
    %v33 = vsel %vm31, %v30, 0.0
    %v34 = vadd.f32 %v32, %v33
    %v35 = vrot.slane %v34, 4
    %v36 = vadd.f32 %v34, %v35
    %v37 = vrot.slane %v36, 2
    %v38 = vadd.f32 %v36, %v37
    %v39 = vrot.slane %v38, 1
    %v40 = vadd.f32 %v38, %v39
    %v41 = vmul.f32 %v40, 0.0625
    %v42 = vmul.f32 %v29, %v29
    %v43 = vmul.f32 %v30, %v30
    %v44 = vsel %vm31, %v42, 0.0
    %v45 = vsel %vm31, %v43, 0.0
    %v46 = vadd.f32 %v44, %v45
    %v47 = vrot.slane %v46, 4
    %v48 = vadd.f32 %v46, %v47
    %v49 = vrot.slane %v48, 2
    %v50 = vadd.f32 %v48, %v49
    %v51 = vrot.slane %v50, 1
    %v52 = vadd.f32 %v50, %v51
    %v53 = vmul.f32 %v52, 0.0625
    %v54 = vmul.f32 %v41, %v41
    %v55 = vsub.f32 %v53, %v54
    %v56 = vmax.f32 %v55, 0.0
    %v57 = vadd.f32 %v56, 1e-05
    %v58 = vrsqrt.pop %v57
    %v59 = vld [vmem:[%s1] sm:$0x1]
    %v60 = vmul.f32 %v59, %v58
    %v61 = vld [vmem:[%s2] sm:$0x1]
    %v62 = vmul.f32 %v41, %v60
    %v63 = vsub.f32 %v61, %v62
    %v65 = vlaneseq
    %v66 = vshrl.u32 %v65, 7
    %v67 = vsub.s32 0, %v66
    %v68 = vrot.slane %v60, %v67
    %v70 = vmul.f32 %v29, %v68
    %v71 = vmul.f32 %v30, %v68
    %v73 = vlaneseq
    %v74 = vshrl.u32 %v73, 7
    %v75 = vsub.s32 0, %v74
    %v76 = vrot.slane %v63, %v75
    %v78 = vadd.f32 %v70, %v76
    %v79 = vadd.f32 %v71, %v76
    %80 = vst.msk [vmem:[#allocation5] sm:$0xff] %vm31, %v78
    %81 = vst.msk [vmem:[#allocation5 + $0x8] sm:$0xff] %vm31, %v79
    // Predicated region
    $region18: #{tpu_custom_call.1} parent=1 // pred_check
      _
    $region19: #{tpu_custom_call.1} parent=1 // pred_check_branch
      %83 = sbr.rel (0) target = $region21
    $region20: #{tpu_custom_call.1} parent=1 // pred_region
      %s85 = ssub.s32 256, 256
      %86 = vsyncadd [#allocation4], %s85
      %s87 = sshll.u32 [#allocation5], 4
      %s88 = int_to_ptr.vmem [resolvable:$true] %s87
      %93 = dma.vmem_to_hbm [thread:$0]  %s88, 256, %s3, [#allocation4], 128, 128, 8
    $region21: #{tpu_custom_call.1} parent=1 // pred_fallthru
      _
    // Predicated region
    $region22: #{tpu_custom_call.1} parent=1 // pred_check
      _
    $region23: #{tpu_custom_call.1} parent=1 // pred_check_branch
      %95 = sbr.rel (0) target = $region25
    $region24: #{tpu_custom_call.1} parent=1 // pred_region
      %96 = dma.done [#allocation4], 256
    $region25: #{tpu_custom_call.1} parent=1 // pred_fallthru
      _
    %97 = vsyncpa [#allocation3], 1
    %98 = vsyncpa [#allocation4], 1

</llo_original>
